<compile_context>
chip_gen: v5e
topology: v5e:2x2
jax: 0.10.0
libtpu: 0.0.40
codegen_flags: <defaults>
</compile_context>

<pallas_src>
import functools

import jax
import jax.numpy as jnp
from jax.experimental import pallas as pl
from jax.experimental.pallas import tpu as pltpu

LATENT_DIM = 100
NOISE_K = 128                # padded noise contraction (multiple of 128 lanes)
NUM_CLASSES = 10
EMB_ROWS = 16                # folded embedding table rows, padded 10 -> 16
HIDDEN = (128, 256, 512)
PAD_CLASSES = 128            # lane-dense output width (multiple of 128)


def _leaky_relu(x, slope=0.2):
    return jnp.where(x > 0, x, slope * x)


def _round_up(x, m):
    return ((x + m - 1) // m) * m


def _cdiv(a, b):
    return (a + b - 1) // b


# --------------------------------------------------------------------------- #
# Kernel: one batch tile of the fused MLP.
# --------------------------------------------------------------------------- #
def generator_mlp_kernel(labels_ref, noise_ref, table_ref,
                         w1_ref, w2_ref, b2_ref, w3_ref, b3_ref,
                         w4_ref, b4_ref, out_ref):
    cdt = w1_ref.dtype                                          # bf16 compute dtype
    bt = labels_ref.shape[0]

    # In-kernel embedding lookup: exact row selection from the resident f32
    # folded table via an f32 one-hot matmul (padded rows of the table are 0).
    lbl = labels_ref[...]                                       # (bt, 1) int32
    cls = jax.lax.broadcasted_iota(jnp.int32, (bt, EMB_ROWS), 1)
    onehot = (cls == lbl).astype(jnp.float32)                   # (bt, 16) f32
    emb = jnp.dot(onehot, table_ref[...],
                  preferred_element_type=jnp.float32)           # (bt, 128) f32

    # Layer 1: bf16 noise (K padded to 128 with zeros) against the padded
    # noise half of W1; the embedding half (+ b1) is the `emb` term above.
    h = jnp.dot(noise_ref[...], w1_ref[...],
                preferred_element_type=jnp.float32) + emb
    h = _leaky_relu(h)                                          # (bt, 128) f32

    h = jnp.dot(h.astype(cdt), w2_ref[...],
                preferred_element_type=jnp.float32) + b2_ref[...]
    h = _leaky_relu(h)                                          # (bt, 256) f32

    h = jnp.dot(h.astype(cdt), w3_ref[...],
                preferred_element_type=jnp.float32) + b3_ref[...]
    h = _leaky_relu(h)                                          # (bt, 512) f32

    # Lane-dense (bt, 128) logits; padded columns carry bias -1e30 -> exp ~ 0,
    # so the softmax over 128 lanes equals the softmax over the real 10.
    logits = jnp.dot(h.astype(cdt), w4_ref[...],
                     preferred_element_type=jnp.float32) + b4_ref[...]

    m = jnp.max(logits, axis=-1, keepdims=True)
    e = jnp.exp(logits - m)
    denom = jnp.sum(e, axis=-1, keepdims=True)
    out_ref[...] = (e * pl.reciprocal(denom, approx=True)).astype(out_ref.dtype)


# --------------------------------------------------------------------------- #
# Parameter preparation (done once): fold embedding into layer 1, pad layers.
# --------------------------------------------------------------------------- #
def prepare_params(params, compute_dtype=jnp.bfloat16):
    w1 = params["w1"]                                           # (200, 128) f32

    # (16, 128) folded per-label row term: embed @ W1[:latent] + b1, rows
    # 10..15 are zero padding (never selected).  Stays f32 for accuracy.
    table = params["embed"] @ w1[:LATENT_DIM] + params["b1"]
    table_p = jnp.zeros((EMB_ROWS, HIDDEN[0]), jnp.float32)
    table_p = table_p.at[:NUM_CLASSES].set(table)

    # Noise half of W1, K padded 100 -> 128 with zero rows (lane/MXU aligned).
    w1n = jnp.zeros((NOISE_K, HIDDEN[0]), jnp.float32)
    w1n = w1n.at[:LATENT_DIM].set(w1[LATENT_DIM:])

    # Pad the final layer to a lane-dense 128-wide output.
    w4p = jnp.zeros((HIDDEN[2], PAD_CLASSES), jnp.float32)
    w4p = w4p.at[:, :NUM_CLASSES].set(params["w4"])
    b4p = jnp.full((1, PAD_CLASSES), -1e30, jnp.float32)        # keep f32!
    b4p = b4p.at[:, :NUM_CLASSES].set(params["b4"])

    return {
        "emb_table": table_p,                                   # (16, 128) f32
        "w1": w1n.astype(compute_dtype),                        # (128, 128) bf16
        "w2": params["w2"].astype(compute_dtype),               # (128, 256) bf16
        "b2": params["b2"].astype(jnp.float32),                 # (1, 256)
        "w3": params["w3"].astype(compute_dtype),               # (256, 512) bf16
        "b3": params["b3"].astype(jnp.float32),                 # (1, 512)
        "w4": w4p.astype(compute_dtype),                        # (512, 128) bf16
        "b4": b4p,                                              # (1, 128) f32
    }


# --------------------------------------------------------------------------- #
# Forward wrapper.
# --------------------------------------------------------------------------- #
def _choose_tile(B, batch_tile):
    """Batch tile: multiple of 16 (bf16 sublanes), >=2 grid steps when possible
    (v7x has 2 TensorCores), capped so per-tile VMEM stays small everywhere."""
    n_tiles = max(2, _cdiv(B, batch_tile))
    return max(16, _round_up(_cdiv(B, n_tiles), 16))


@functools.partial(jax.jit, static_argnames=("batch_tile", "out_dtype"))
def generator_forward(noise, labels, kparams, *, batch_tile=2048,
                      out_dtype=jnp.float32):
    """noise: (B, latent_dim) f32, labels: (B,) int32 -> (B, num_classes)."""
    B = noise.shape[0]
    bt = _choose_tile(B, batch_tile)
    b_pad = _round_up(B, bt)

    # Single fused pad (batch tail + K 100->128) + bf16 cast; no separate
    # pre-gathered embedding array is materialized any more.
    noise_p = jnp.pad(noise, ((0, b_pad - B), (0, NOISE_K - LATENT_DIM))
                      ).astype(jnp.bfloat16)
    labels_p = jnp.pad(labels.astype(jnp.int32).reshape(B, 1),
                       ((0, b_pad - B), (0, 0)))

    def row_spec(width):                                        # batch-tiled arrays
        return pl.BlockSpec((bt, width), lambda i: (i, 0))

    def res_spec(shape):                                        # resident weights
        return pl.BlockSpec(shape, lambda i: (0, 0))

    out_full = pl.pallas_call(
        generator_mlp_kernel,
        out_shape=jax.ShapeDtypeStruct((b_pad, PAD_CLASSES), out_dtype),
        grid=(b_pad // bt,),
        in_specs=[
            row_spec(1),                                        # labels tile (int32)
            row_spec(NOISE_K),                                  # noise tile (bf16)
            res_spec((EMB_ROWS, HIDDEN[0])),                    # folded emb table f32
            res_spec((NOISE_K, HIDDEN[0])),                     # w1 (noise half, padded)
            res_spec((HIDDEN[0], HIDDEN[1])),                   # w2
            res_spec((1, HIDDEN[1])),                           # b2
            res_spec((HIDDEN[1], HIDDEN[2])),                   # w3
            res_spec((1, HIDDEN[2])),                           # b3
            res_spec((HIDDEN[2], PAD_CLASSES)),                 # w4 (padded)
            res_spec((1, PAD_CLASSES)),                         # b4 (padded, f32)
        ],
        out_specs=row_spec(PAD_CLASSES),
        compiler_params=pltpu.CompilerParams(
            dimension_semantics=("parallel",),                  # megacore / v7x 2-TC
            # At bt=2048: double-buffered bf16 noise (1 MiB) + int32 labels +
            # out tiles (<=2 MiB) + resident bf16 weights (~0.5 MiB) + f32
            # activation temporaries (<=8 MiB) -> well under 32 MiB, which in
            # turn fits every generation including v7x's 64 MiB physical VMEM.
            vmem_limit_bytes=32 * 1024 * 1024,
        ),
    )(labels_p, noise_p,
      kparams["emb_table"], kparams["w1"], kparams["w2"], kparams["b2"],
      kparams["w3"], kparams["b3"], kparams["w4"], kparams["b4"])

    return out_full[:B, :NUM_CLASSES]


# --------------------------------------------------------------------------- #
# Init + reference.
# --------------------------------------------------------------------------- #
def init_params(key):
    """Deterministic synthetic parameters matching the PyTorch module shapes."""
    dims = [(2 * LATENT_DIM, 128), (128, 256), (256, 512), (512, NUM_CLASSES)]
    keys = jax.random.split(key, 1 + 2 * len(dims))
    params = {"embed": jax.random.normal(keys[0], (NUM_CLASSES, LATENT_DIM),
                                         dtype=jnp.float32)}
    for i, (fan_in, fan_out) in enumerate(dims):
        bound = 1.0 / (fan_in ** 0.5)   # PyTorch nn.Linear default init range
        params[f"w{i+1}"] = jax.random.uniform(
            keys[1 + 2 * i], (fan_in, fan_out), jnp.float32, -bound, bound)
        params[f"b{i+1}"] = jax.random.uniform(
            keys[2 + 2 * i], (1, fan_out), jnp.float32, -bound, bound)
    return params


def _reference_forward(noise, labels, params, compute_dtype=jnp.bfloat16):
    """Pure-JAX reference mirroring the kernel's bf16-matmul / f32-accum math."""
    w1 = params["w1"]
    table = params["embed"] @ w1[:LATENT_DIM] + params["b1"]
    row = jnp.take(table, labels, axis=0)

    def dot(x, w):
        return jnp.dot(x.astype(compute_dtype), w.astype(compute_dtype),
                       preferred_element_type=jnp.float32)

    h = _leaky_relu(dot(noise, w1[LATENT_DIM:]) + row)
    h = _leaky_relu(dot(h, params["w2"]) + params["b2"])
    h = _leaky_relu(dot(h, params["w3"]) + params["b3"])
    logits = dot(h, params["w4"]) + params["b4"]
    return jax.nn.softmax(logits, axis=1)


if __name__ == "__main__":
    key = jax.random.PRNGKey(0)
    k_params, k_noise, k_labels = jax.random.split(key, 3)

    batch = 8
    params = init_params(k_params)
    kparams = prepare_params(params)

    noise = jax.random.normal(k_noise, (batch, LATENT_DIM), dtype=jnp.float32)
    labels = jax.random.randint(k_labels, (batch,), 0, NUM_CLASSES, dtype=jnp.int32)

    out = generator_forward(noise, labels, kparams)
    out = jax.block_until_ready(out)

    ref = _reference_forward(noise, labels, params)
    assert out.shape == (batch, NUM_CLASSES)
    # pl.reciprocal(approx=True) normalizes to ~1e-3 relative accuracy.
    assert jnp.allclose(out, ref, atol=5e-3, rtol=5e-3), (
        f"max abs diff {float(jnp.max(jnp.abs(out - ref)))}")
    assert jnp.allclose(jnp.sum(out, axis=1), 1.0, atol=5e-3)

    print("KERNEL_OK")
</pallas_src>

<mosaic_0001>
module attributes {stable_mosaic.version = 11 : i64} {
  func.func @generator_mlp_kernel(%arg0: i32, %arg1: memref<16x1xi32, #tpu.memory_space<vmem>>, %arg2: memref<16x128xbf16, #tpu.memory_space<vmem>>, %arg3: memref<16x128xf32, #tpu.memory_space<vmem>>, %arg4: memref<128x128xbf16, #tpu.memory_space<vmem>>, %arg5: memref<128x256xbf16, #tpu.memory_space<vmem>>, %arg6: memref<1x256xf32, #tpu.memory_space<vmem>>, %arg7: memref<256x512xbf16, #tpu.memory_space<vmem>>, %arg8: memref<1x512xf32, #tpu.memory_space<vmem>>, %arg9: memref<512x128xbf16, #tpu.memory_space<vmem>>, %arg10: memref<1x128xf32, #tpu.memory_space<vmem>>, %arg11: memref<16x128xf32, #tpu.memory_space<vmem>>) attributes {dimension_semantics = [#tpu.dimension_semantics<parallel>], iteration_bounds = array<i64: 1>, scalar_prefetch = 0 : i64, scratch_operands = 0 : i64, tpu.core_type = #tpu.core_type<tc>, window_params = [{transform_indices = @transform_0, window_bounds = array<i64: 16, 1>}, {transform_indices = @transform_1, window_bounds = array<i64: 16, 128>}, {pipeline_mode = #tpu.pipeline_mode<synchronous>, transform_indices = @transform_2, window_bounds = array<i64: 16, 128>}, {pipeline_mode = #tpu.pipeline_mode<synchronous>, transform_indices = @transform_3, window_bounds = array<i64: 128, 128>}, {pipeline_mode = #tpu.pipeline_mode<synchronous>, transform_indices = @transform_4, window_bounds = array<i64: 128, 256>}, {pipeline_mode = #tpu.pipeline_mode<synchronous>, transform_indices = @transform_5, window_bounds = array<i64: 1, 256>}, {pipeline_mode = #tpu.pipeline_mode<synchronous>, transform_indices = @transform_6, window_bounds = array<i64: 256, 512>}, {pipeline_mode = #tpu.pipeline_mode<synchronous>, transform_indices = @transform_7, window_bounds = array<i64: 1, 512>}, {pipeline_mode = #tpu.pipeline_mode<synchronous>, transform_indices = @transform_8, window_bounds = array<i64: 512, 128>}, {pipeline_mode = #tpu.pipeline_mode<synchronous>, transform_indices = @transform_9, window_bounds = array<i64: 1, 128>}, {transform_indices = @transform_10, window_bounds = array<i64: 16, 128>}]} {
    %c0 = arith.constant 0 : index
    %c0_0 = arith.constant 0 : index
    %0 = vector.load %arg1[%c0, %c0_0] : memref<16x1xi32, #tpu.memory_space<vmem>>, vector<16x1xi32>
    %1 = tpu.iota {dimensions = array<i32: 1>} : vector<16x16xi32>
    %2 = vector.broadcast %0 : vector<16x1xi32> to vector<16x16xi32>
    %3 = arith.cmpi eq, %1, %2 : vector<16x16xi32>
    %4 = arith.extui %3 : vector<16x16xi1> to vector<16x16xi32>
    %5 = arith.sitofp %4 : vector<16x16xi32> to vector<16x16xf32>
    %c0_1 = arith.constant 0 : index
    %c0_2 = arith.constant 0 : index
    %6 = vector.load %arg3[%c0_1, %c0_2] : memref<16x128xf32, #tpu.memory_space<vmem>>, vector<16x128xf32>
    %cst = arith.constant dense<0.000000e+00> : vector<16x128xf32>
    %7 = tpu.matmul %5, %6, %cst {dimension_numbers = #tpu.dot_dimension_numbers<[1], [0], [0], [1], [0, 0, 1, 1], [], []>} : vector<16x16xf32>, vector<16x128xf32>, vector<16x128xf32> -> vector<16x128xf32>
    %c0_3 = arith.constant 0 : index
    %c0_4 = arith.constant 0 : index
    %8 = vector.load %arg2[%c0_3, %c0_4] : memref<16x128xbf16, #tpu.memory_space<vmem>>, vector<16x128xbf16>
    %c0_5 = arith.constant 0 : index
    %c0_6 = arith.constant 0 : index
    %9 = vector.load %arg4[%c0_5, %c0_6] : memref<128x128xbf16, #tpu.memory_space<vmem>>, vector<128x128xbf16>
    %cst_7 = arith.constant dense<0.000000e+00> : vector<16x128xf32>
    %10 = tpu.matmul %8, %9, %cst_7 {dimension_numbers = #tpu.dot_dimension_numbers<[1], [0], [0], [1], [0, 0, 1, 1], [], []>} : vector<16x128xbf16>, vector<128x128xbf16>, vector<16x128xf32> -> vector<16x128xf32>
    %11 = arith.addf %10, %7 : vector<16x128xf32>
    %cst_8 = arith.constant 0.000000e+00 : f32
    %12 = vector.broadcast %cst_8 : f32 to vector<16x128xf32>
    %13 = arith.cmpf ogt, %11, %12 : vector<16x128xf32>
    %cst_9 = arith.constant 2.000000e-01 : f32
    %14 = vector.broadcast %cst_9 : f32 to vector<16x128xf32>
    %15 = arith.mulf %14, %11 : vector<16x128xf32>
    %16 = arith.select %13, %11, %15 : vector<16x128xi1>, vector<16x128xf32>
    %17 = arith.truncf %16 : vector<16x128xf32> to vector<16x128xbf16>
    %c0_10 = arith.constant 0 : index
    %c0_11 = arith.constant 0 : index
    %18 = vector.load %arg5[%c0_10, %c0_11] : memref<128x256xbf16, #tpu.memory_space<vmem>>, vector<128x256xbf16>
    %cst_12 = arith.constant dense<0.000000e+00> : vector<16x256xf32>
    %19 = tpu.matmul %17, %18, %cst_12 {dimension_numbers = #tpu.dot_dimension_numbers<[1], [0], [0], [1], [0, 0, 1, 1], [], []>} : vector<16x128xbf16>, vector<128x256xbf16>, vector<16x256xf32> -> vector<16x256xf32>
    %c0_13 = arith.constant 0 : index
    %c0_14 = arith.constant 0 : index
    %20 = vector.load %arg6[%c0_13, %c0_14] : memref<1x256xf32, #tpu.memory_space<vmem>>, vector<1x256xf32>
    %21 = vector.broadcast %20 : vector<1x256xf32> to vector<16x256xf32>
    %22 = arith.addf %19, %21 : vector<16x256xf32>
    %cst_15 = arith.constant 0.000000e+00 : f32
    %23 = vector.broadcast %cst_15 : f32 to vector<16x256xf32>
    %24 = arith.cmpf ogt, %22, %23 : vector<16x256xf32>
    %cst_16 = arith.constant 2.000000e-01 : f32
    %25 = vector.broadcast %cst_16 : f32 to vector<16x256xf32>
    %26 = arith.mulf %25, %22 : vector<16x256xf32>
    %27 = arith.select %24, %22, %26 : vector<16x256xi1>, vector<16x256xf32>
    %28 = arith.truncf %27 : vector<16x256xf32> to vector<16x256xbf16>
    %c0_17 = arith.constant 0 : index
    %c0_18 = arith.constant 0 : index
    %29 = vector.load %arg7[%c0_17, %c0_18] : memref<256x512xbf16, #tpu.memory_space<vmem>>, vector<256x512xbf16>
    %cst_19 = arith.constant dense<0.000000e+00> : vector<16x512xf32>
    %30 = tpu.matmul %28, %29, %cst_19 {dimension_numbers = #tpu.dot_dimension_numbers<[1], [0], [0], [1], [0, 0, 1, 1], [], []>} : vector<16x256xbf16>, vector<256x512xbf16>, vector<16x512xf32> -> vector<16x512xf32>
    %c0_20 = arith.constant 0 : index
    %c0_21 = arith.constant 0 : index
    %31 = vector.load %arg8[%c0_20, %c0_21] : memref<1x512xf32, #tpu.memory_space<vmem>>, vector<1x512xf32>
    %32 = vector.broadcast %31 : vector<1x512xf32> to vector<16x512xf32>
    %33 = arith.addf %30, %32 : vector<16x512xf32>
    %cst_22 = arith.constant 0.000000e+00 : f32
    %34 = vector.broadcast %cst_22 : f32 to vector<16x512xf32>
    %35 = arith.cmpf ogt, %33, %34 : vector<16x512xf32>
    %cst_23 = arith.constant 2.000000e-01 : f32
    %36 = vector.broadcast %cst_23 : f32 to vector<16x512xf32>
    %37 = arith.mulf %36, %33 : vector<16x512xf32>
    %38 = arith.select %35, %33, %37 : vector<16x512xi1>, vector<16x512xf32>
    %39 = arith.truncf %38 : vector<16x512xf32> to vector<16x512xbf16>
    %c0_24 = arith.constant 0 : index
    %c0_25 = arith.constant 0 : index
    %40 = vector.load %arg9[%c0_24, %c0_25] : memref<512x128xbf16, #tpu.memory_space<vmem>>, vector<512x128xbf16>
    %cst_26 = arith.constant dense<0.000000e+00> : vector<16x128xf32>
    %41 = tpu.matmul %39, %40, %cst_26 {dimension_numbers = #tpu.dot_dimension_numbers<[1], [0], [0], [1], [0, 0, 1, 1], [], []>} : vector<16x512xbf16>, vector<512x128xbf16>, vector<16x128xf32> -> vector<16x128xf32>
    %c0_27 = arith.constant 0 : index
    %c0_28 = arith.constant 0 : index
    %42 = vector.load %arg10[%c0_27, %c0_28] : memref<1x128xf32, #tpu.memory_space<vmem>>, vector<1x128xf32>
    %43 = vector.broadcast %42 : vector<1x128xf32> to vector<16x128xf32>
    %44 = arith.addf %41, %43 : vector<16x128xf32>
    %cst_29 = arith.constant dense<0xFF800000> : vector<16xf32>
    %45 = vector.multi_reduction <maximumf>, %44, %cst_29 [1] : vector<16x128xf32> to vector<16xf32>
    %46 = vector.shape_cast %45 : vector<16xf32> to vector<16x1xf32>
    %47 = vector.broadcast %46 : vector<16x1xf32> to vector<16x128xf32>
    %48 = arith.subf %44, %47 : vector<16x128xf32>
    %49 = math.exp %48 : vector<16x128xf32>
    %cst_30 = arith.constant dense<0.000000e+00> : vector<16xf32>
    %50 = vector.multi_reduction <add>, %49, %cst_30 [1] : vector<16x128xf32> to vector<16xf32>
    %51 = vector.shape_cast %50 : vector<16xf32> to vector<16x1xf32>
    %52 = tpu.reciprocal %51 {approx = true} : vector<16x1xf32> -> vector<16x1xf32>
    %53 = vector.broadcast %52 : vector<16x1xf32> to vector<16x128xf32>
    %54 = arith.mulf %49, %53 : vector<16x128xf32>
    %c0_31 = arith.constant 0 : index
    %c0_32 = arith.constant 0 : index
    %55 = vector.load %arg11[%c0_31, %c0_32] : memref<16x128xf32, #tpu.memory_space<vmem>>, vector<16x128xf32>
    tpu.vector_store %arg11[%c0_31, %c0_32], %54 {strides = array<i32>} : memref<16x128xf32, #tpu.memory_space<vmem>>, vector<16x128xf32>,
    return
  }
  func.func @transform_0(%arg0: i32) -> (i32, i32) {
    %c0_i32 = arith.constant 0 : i32
    %c0_i32_0 = arith.constant 0 : i32
    return %arg0, %c0_i32 : i32, i32
  }
  func.func @transform_1(%arg0: i32) -> (i32, i32) {
    %c0_i32 = arith.constant 0 : i32
    %c0_i32_0 = arith.constant 0 : i32
    return %arg0, %c0_i32 : i32, i32
  }
  func.func @transform_2(%arg0: i32) -> (i32, i32) {
    %c0_i32 = arith.constant 0 : i32
    %c0_i32_0 = arith.constant 0 : i32
    %c0_i32_1 = arith.constant 0 : i32
    return %c0_i32, %c0_i32_0 : i32, i32
  }
  func.func @transform_3(%arg0: i32) -> (i32, i32) {
    %c0_i32 = arith.constant 0 : i32
    %c0_i32_0 = arith.constant 0 : i32
    %c0_i32_1 = arith.constant 0 : i32
    return %c0_i32, %c0_i32_0 : i32, i32
  }
  func.func @transform_4(%arg0: i32) -> (i32, i32) {
    %c0_i32 = arith.constant 0 : i32
    %c0_i32_0 = arith.constant 0 : i32
    %c0_i32_1 = arith.constant 0 : i32
    return %c0_i32, %c0_i32_0 : i32, i32
  }
  func.func @transform_5(%arg0: i32) -> (i32, i32) {
    %c0_i32 = arith.constant 0 : i32
    %c0_i32_0 = arith.constant 0 : i32
    %c0_i32_1 = arith.constant 0 : i32
    return %c0_i32, %c0_i32_0 : i32, i32
  }
  func.func @transform_6(%arg0: i32) -> (i32, i32) {
    %c0_i32 = arith.constant 0 : i32
    %c0_i32_0 = arith.constant 0 : i32
    %c0_i32_1 = arith.constant 0 : i32
    return %c0_i32, %c0_i32_0 : i32, i32
  }
  func.func @transform_7(%arg0: i32) -> (i32, i32) {
    %c0_i32 = arith.constant 0 : i32
    %c0_i32_0 = arith.constant 0 : i32
    %c0_i32_1 = arith.constant 0 : i32
    return %c0_i32, %c0_i32_0 : i32, i32
  }
  func.func @transform_8(%arg0: i32) -> (i32, i32) {
    %c0_i32 = arith.constant 0 : i32
    %c0_i32_0 = arith.constant 0 : i32
    %c0_i32_1 = arith.constant 0 : i32
    return %c0_i32, %c0_i32_0 : i32, i32
  }
  func.func @transform_9(%arg0: i32) -> (i32, i32) {
    %c0_i32 = arith.constant 0 : i32
    %c0_i32_0 = arith.constant 0 : i32
    %c0_i32_1 = arith.constant 0 : i32
    return %c0_i32, %c0_i32_0 : i32, i32
  }
  func.func @transform_10(%arg0: i32) -> (i32, i32) {
    %c0_i32 = arith.constant 0 : i32
    %c0_i32_0 = arith.constant 0 : i32
    return %arg0, %c0_i32 : i32, i32
  }
}

</mosaic_0001>

<llo_original>
// kernel: generator_forward.1
$region0: #{generator_forward.1}
  #allocation0 [shape = 'u32[]', space=smem, size = 0x4, offset = 0x4, fixed_abs, tag = 'smem constant byte address 0x4 - core index']
  #allocation1 [shape = 'u32[72,128]{1,0:T(1,128)}', space=vmem, size = 0x9000, scoped, tag = 'internal scratch']
  %s0 = inlined_call_operand.vmem [shape: s32[16,1], index: 0, kind: input, shape index: {}]
  %s1 = inlined_call_operand.vmem [shape: bf16[16,128], index: 1, kind: input, shape index: {}]
  %s2 = inlined_call_operand.vmem [shape: f32[16,128], index: 2, kind: input, shape index: {}]
  %s3 = inlined_call_operand.hbm [shape: bf16[128,128], index: 3, kind: input, shape index: {}]
  %s4 = inlined_call_operand.hbm [shape: bf16[128,256], index: 4, kind: input, shape index: {}]
  %s5 = inlined_call_operand.vmem [shape: f32[1,256], index: 5, kind: input, shape index: {}]
  %s6 = inlined_call_operand.hbm [shape: bf16[256,512], index: 6, kind: input, shape index: {}]
  %s7 = inlined_call_operand.vmem [shape: f32[1,512], index: 7, kind: input, shape index: {}]
  %s8 = inlined_call_operand.hbm [shape: bf16[512,128], index: 8, kind: input, shape index: {}]
  %s9 = inlined_call_operand.vmem [shape: f32[1,128], index: 9, kind: input, shape index: {}]
  %s10 = inlined_call_operand.vmem [shape: f32[16,128], index: 10, kind: output, shape index: {}]
  %s11 = sld [smem:[#allocation0]]
  $region66: #{generator_forward.1} parent=0
    _
  %s13 = ssub.s32 1, %s11
  %s14 = scalar_select 0, %s13, %s11
  $region1: #{generator_forward.1} parent=0
    #allocation2 [shape = 'u8[32768]{0}', space=vmem, size = 0x8000, scoped, tag = 'input window, operand 3, single buffered']
    #allocation3 [shape = 's32[1]{0}', space=sflag, size = 0x4, scoped, tag = 'scoped memory for generator_forward.1']
    #allocation4 [shape = 'u8[65536]{0}', space=vmem, size = 0x10000, scoped, tag = 'input window, operand 4, single buffered']
    #allocation5 [shape = 's32[1]{0}', space=sflag, size = 0x4, scoped, tag = 'scoped memory for generator_forward.1']
    #allocation6 [shape = 'u8[262144]{0}', space=vmem, size = 0x40000, scoped, tag = 'input window, operand 6, single buffered']
    #allocation7 [shape = 'u8[131072]{0}', space=vmem, size = 0x20000, scoped, tag = 'input window, operand 8, single buffered']
    #allocation8 [shape = 's32[1]{0}', space=sflag, size = 0x4, scoped, tag = 'scoped memory for generator_forward.1']
    %15 = vsyncpa [#allocation3], 0
    %16 = vsyncpa [#allocation5], 0
    %17 = vsyncpa [#allocation8], 0
    // Predicated region
    $region2: #{generator_forward.1} parent=1 // pred_check
      _
    $region3: #{generator_forward.1} parent=1 // pred_check_branch
      %19 = sbr.rel (0) target = $region5
    $region4: #{generator_forward.1} parent=1 // pred_region
      _
    $region5: #{generator_forward.1} parent=1 // pred_fallthru
      _
    // Predicated region
    $region6: #{generator_forward.1} parent=1 // pred_check
      _
    $region7: #{generator_forward.1} parent=1 // pred_check_branch
      %21 = sbr.rel (0) target = $region9
    $region8: #{generator_forward.1} parent=1 // pred_region
      _
    $region9: #{generator_forward.1} parent=1 // pred_fallthru
      _
    // Predicated region
    $region10: #{generator_forward.1} parent=1 // pred_check
      _
    $region11: #{generator_forward.1} parent=1 // pred_check_branch
      %23 = sbr.rel (0) target = $region13
    $region12: #{generator_forward.1} parent=1 // pred_region
      _
    $region13: #{generator_forward.1} parent=1 // pred_fallthru
      _
    // Predicated region
    $region14: #{generator_forward.1} parent=1 // pred_check
      _
    $region15: #{generator_forward.1} parent=1 // pred_check_branch
      %25 = sbr.rel (0) target = $region17
    $region16: #{generator_forward.1} parent=1 // pred_region
      %27 = vsyncadd [#allocation3], 0
      %s28 = sshll.u32 %s3, 4
      %s29 = int_to_ptr.hbm [resolvable:$true] %s28
      %s30 = sshll.u32 [#allocation2], 4
      %s31 = int_to_ptr.vmem [resolvable:$true] %s30
      %36 = dma.hbm_to_vmem [thread:$0]  %s29, 1024, %s31, [#allocation3], 64, 64, 4
    $region17: #{generator_forward.1} parent=1 // pred_fallthru
      _
    // Predicated region
    $region18: #{generator_forward.1} parent=1 // pred_check
      _
    $region19: #{generator_forward.1} parent=1 // pred_check_branch
      %38 = sbr.rel (0) target = $region21
    $region20: #{generator_forward.1} parent=1 // pred_region
      %40 = vsyncadd [#allocation5], 0
      %s41 = sshll.u32 %s4, 4
      %s42 = int_to_ptr.hbm [resolvable:$true] %s41
      %s43 = sshll.u32 [#allocation4], 4
      %s44 = int_to_ptr.vmem [resolvable:$true] %s43
      %49 = dma.hbm_to_vmem [thread:$0]  %s42, 2048, %s44, [#allocation5], 128, 128, 8
    $region21: #{generator_forward.1} parent=1 // pred_fallthru
      _
    // Predicated region
    $region22: #{generator_forward.1} parent=1 // pred_check
      _
    $region23: #{generator_forward.1} parent=1 // pred_check_branch
      %51 = sbr.rel (0) target = $region25
    $region24: #{generator_forward.1} parent=1 // pred_region
      _
    $region25: #{generator_forward.1} parent=1 // pred_fallthru
      _
    // Predicated region
    $region26: #{generator_forward.1} parent=1 // pred_check
      _
    $region27: #{generator_forward.1} parent=1 // pred_check_branch
      %53 = sbr.rel (0) target = $region29
    $region28: #{generator_forward.1} parent=1 // pred_region
      %55 = vsyncadd [#allocation5], 0
      %s56 = sshll.u32 %s6, 4
      %s57 = int_to_ptr.hbm [resolvable:$true] %s56
      %s58 = sshll.u32 [#allocation6], 4
      %s59 = int_to_ptr.vmem [resolvable:$true] %s58
      %64 = dma.hbm_to_vmem [thread:$0]  %s57, 8192, %s59, [#allocation5], 256, 256, 16
    $region29: #{generator_forward.1} parent=1 // pred_fallthru
      _
    // Predicated region
    $region30: #{generator_forward.1} parent=1 // pred_check
      _
    $region31: #{generator_forward.1} parent=1 // pred_check_branch
      %66 = sbr.rel (0) target = $region33
    $region32: #{generator_forward.1} parent=1 // pred_region
      _
    $region33: #{generator_forward.1} parent=1 // pred_fallthru
      _
    // Predicated region
    $region34: #{generator_forward.1} parent=1 // pred_check
      _
    $region35: #{generator_forward.1} parent=1 // pred_check_branch
      %68 = sbr.rel (0) target = $region37
    $region36: #{generator_forward.1} parent=1 // pred_region
      %70 = vsyncadd [#allocation8], 0
      %s71 = sshll.u32 %s8, 4
      %s72 = int_to_ptr.hbm [resolvable:$true] %s71
      %s73 = sshll.u32 [#allocation7], 4
      %s74 = int_to_ptr.vmem [resolvable:$true] %s73
      %79 = dma.hbm_to_vmem [thread:$0]  %s72, 4096, %s74, [#allocation8], 64, 64, 4
    $region37: #{generator_forward.1} parent=1 // pred_fallthru
      _
    // Predicated region
    $region38: #{generator_forward.1} parent=1 // pred_check
      _
    $region39: #{generator_forward.1} parent=1 // pred_check_branch
      %81 = sbr.rel (0) target = $region41
    $region40: #{generator_forward.1} parent=1 // pred_region
      _
    $region41: #{generator_forward.1} parent=1 // pred_fallthru
      _
    // Predicated region
    $region42: #{generator_forward.1} parent=1 // pred_check
      _
    $region43: #{generator_forward.1} parent=1 // pred_check_branch
      %83 = sbr.rel (0) target = $region45
    $region44: #{generator_forward.1} parent=1 // pred_region
      %85 = dma.done [#allocation3], 1024
    $region45: #{generator_forward.1} parent=1 // pred_fallthru
      _
    // Predicated region
    $region46: #{generator_forward.1} parent=1 // pred_check
      _
    $region47: #{generator_forward.1} parent=1 // pred_check_branch
      %87 = sbr.rel (0) target = $region49
    $region48: #{generator_forward.1} parent=1 // pred_region
      %89 = dma.done [#allocation5], 2048
    $region49: #{generator_forward.1} parent=1 // pred_fallthru
      _
    // Predicated region
    $region50: #{generator_forward.1} parent=1 // pred_check
      _
    $region51: #{generator_forward.1} parent=1 // pred_check_branch
      %91 = sbr.rel (0) target = $region53
    $region52: #{generator_forward.1} parent=1 // pred_region
      %93 = dma.done [#allocation5], 8192
    $region53: #{generator_forward.1} parent=1 // pred_fallthru
      _
    // Predicated region
    $region54: #{generator_forward.1} parent=1 // pred_check
      _
    $region55: #{generator_forward.1} parent=1 // pred_check_branch
      %95 = sbr.rel (0) target = $region57
    $region56: #{generator_forward.1} parent=1 // pred_region
      %97 = dma.done [#allocation8], 4096
    $region57: #{generator_forward.1} parent=1 // pred_fallthru
      _
    %v98 = vld [vmem:[%s0] sm:$0xff]
    %v99 = vld [vmem:[%s0 + $0x8] sm:$0xff]
    %v100 = vlaneseq
    %v101 = vand.u32 %v100, 127
    %102 = vset.pattern.permute.xlu0 0
    %103 = vperm.xlu0 %102, %v98
    %v104 = vpop.permute.xlu0 %103
    %105 = vset.pattern.permute.xlu0 0
    %106 = vperm.xlu0 %105, %v99
    %v107 = vpop.permute.xlu0 %106
    %vm108 = vcmp.eq.s32.totalorder %v101, %v104
    %vm109 = vcmp.eq.s32.totalorder %v101, %v107
    %v110 = vsel %vm108, 1, 0
    %v111 = vsel %vm109, 1, 0
    %v112 = vcvt.s32.f32 %v110
    %v113 = vcvt.s32.f32 %v111
    %v114 = vld [vmem:[%s2] sm:$0xff]
    %v115 = vld [vmem:[%s2 + $0x8] sm:$0xff]
    %vm116 = vcmask 130048
    %v118 = vsel %vm116, %v112, 0
    %v121 = vsel %vm116, %v113, 0
    %123 = vmatpush.msra.mxu0 0.0
    %124 = vmatpush.msra.mxu0 0.0
    %125 = vmatpush.msra.mxu0 0.0
    %126 = vmatpush.msra.mxu0 0.0
    %127 = vmatpush.msra.mxu0 0.0
    %128 = vmatpush.msra.mxu0 0.0
    %129 = vmatpush.msra.mxu0 0.0
    %130 = vmatpush.msra.mxu0 0.0
    %131 = vmatpush.msra.mxu0 0.0
    %132 = vmatpush.msra.mxu0 0.0
    %133 = vmatpush.msra.mxu0 0.0
    %134 = vmatpush.msra.mxu0 0.0
    %135 = vmatpush.msra.mxu0 0.0
    %136 = vmatpush.msra.mxu0 0.0
    %137 = vmatpush.msra.mxu0 %v115
    %138 = vmatpush.msra.mxu0 %v114
    %139 = vmatmul.f32.gmra.mxu0 %v118
    %v140 = vpop.f32.mrf.mxu0
    %v141 = vadd.f32 0.0, %v140
    %142 = vmatmul.f32.gmra.mxu0 %v121
    %v143 = vpop.f32.mrf.mxu0
    %v144 = vadd.f32 0.0, %v143
    %145 = vdwg.mxu0
    %v146 = vld [vmem:[%s1] sm:$0xf]
    %v147 = vld [vmem:[%s1 + $0x4] sm:$0xf]
    %v148 = vld [vmem:[#allocation2] sm:$0xf]
    %v149 = vld [vmem:[#allocation2 + $0x4] sm:$0xf]
    %v150 = vld [vmem:[#allocation2 + $0x8] sm:$0xf]
    %v151 = vld [vmem:[#allocation2 + $0xc] sm:$0xf]
    %v152 = vld [vmem:[#allocation2 + $0x10] sm:$0xf]
    %v153 = vld [vmem:[#allocation2 + $0x14] sm:$0xf]
    %v154 = vld [vmem:[#allocation2 + $0x18] sm:$0xf]
    %v155 = vld [vmem:[#allocation2 + $0x1c] sm:$0xf]
    %v156 = vld [vmem:[#allocation2 + $0x20] sm:$0xf]
    %v157 = vld [vmem:[#allocation2 + $0x24] sm:$0xf]
    %v158 = vld [vmem:[#allocation2 + $0x28] sm:$0xf]
    %v159 = vld [vmem:[#allocation2 + $0x2c] sm:$0xf]
    %v160 = vld [vmem:[#allocation2 + $0x30] sm:$0xf]
    %v161 = vld [vmem:[#allocation2 + $0x34] sm:$0xf]
    %v162 = vld [vmem:[#allocation2 + $0x38] sm:$0xf]
    %v163 = vld [vmem:[#allocation2 + $0x3c] sm:$0xf]
    %v166 = vunpack.c.l.b16 %v146
    %v167 = vunpack.c.l.b16 %v147
    %v168 = vpack.c.b16 %v167, %v166
    %v186 = vunpack.c.l.b16 %v148
    %v187 = vunpack.c.l.b16 %v149
    %v188 = vunpack.c.l.b16 %v150
    %v189 = vunpack.c.l.b16 %v151
    %v190 = vunpack.c.l.b16 %v152
    %v191 = vunpack.c.l.b16 %v153
    %v192 = vunpack.c.l.b16 %v154
    %v193 = vunpack.c.l.b16 %v155
    %v194 = vunpack.c.l.b16 %v156
    %v195 = vunpack.c.l.b16 %v157
    %v196 = vunpack.c.l.b16 %v158
    %v197 = vunpack.c.l.b16 %v159
    %v198 = vunpack.c.l.b16 %v160
    %v199 = vunpack.c.l.b16 %v161
    %v200 = vunpack.c.l.b16 %v162
    %v201 = vunpack.c.l.b16 %v163
    %v202 = vpack.c.b16 %v187, %v186
    %v203 = vpack.c.b16 %v189, %v188
    %v204 = vpack.c.b16 %v191, %v190
    %v205 = vpack.c.b16 %v193, %v192
    %v206 = vpack.c.b16 %v195, %v194
    %v207 = vpack.c.b16 %v197, %v196
    %v208 = vpack.c.b16 %v199, %v198
    %v209 = vpack.c.b16 %v201, %v200
    %218 = vmatpush.bf16.msra.mxu0 %v209
    %219 = vmatpush.bf16.msra.mxu0 %v208
    %220 = vmatpush.bf16.msra.mxu0 %v207
    %221 = vmatpush.bf16.msra.mxu0 %v206
    %222 = vmatpush.bf16.msra.mxu0 %v205
    %223 = vmatpush.bf16.msra.mxu0 %v204
    %224 = vmatpush.bf16.msra.mxu0 %v203
    %225 = vmatpush.bf16.msra.mxu0 %v202
    %226 = vmatmul.bf16.gmra.mxu0 %v168
    %v227 = vpop.f32.mrf.mxu0
    %v228 = vadd.f32 %v141, %v227
    %v229 = vpop.f32.mrf.mxu0
    %v230 = vadd.f32 %v144, %v229
    %231 = vdwg.mxu0
    %vm232 = vcmp.gt.f32.partialorder %v228, 0.0
    %vm233 = vcmp.gt.f32.partialorder %v230, 0.0
    %v234 = vmul.f32 %v228, 0.2
    %v235 = vmul.f32 %v230, 0.2
    %v236 = vsel %vm232, %v228, %v234
    %v237 = vsel %vm233, %v230, %v235
    %v238 = vpack.c.bf16 %v237, %v236
    %v239 = vld [vmem:[#allocation4] sm:$0xff]
    %v240 = vld [vmem:[#allocation4 + $0x8] sm:$0xff]
    %v241 = vld [vmem:[#allocation4 + $0x10] sm:$0xff]
    %v242 = vld [vmem:[#allocation4 + $0x18] sm:$0xff]
    %v243 = vld [vmem:[#allocation4 + $0x20] sm:$0xff]
    %v244 = vld [vmem:[#allocation4 + $0x28] sm:$0xff]
    %v245 = vld [vmem:[#allocation4 + $0x30] sm:$0xff]
    %v246 = vld [vmem:[#allocation4 + $0x38] sm:$0xff]
    %v247 = vld [vmem:[#allocation4 + $0x40] sm:$0xff]
    %v248 = vld [vmem:[#allocation4 + $0x48] sm:$0xff]
    %v249 = vld [vmem:[#allocation4 + $0x50] sm:$0xff]
    %v250 = vld [vmem:[#allocation4 + $0x58] sm:$0xff]
    %v251 = vld [vmem:[#allocation4 + $0x60] sm:$0xff]
    %v252 = vld [vmem:[#allocation4 + $0x68] sm:$0xff]
    %v253 = vld [vmem:[#allocation4 + $0x70] sm:$0xff]
    %v254 = vld [vmem:[#allocation4 + $0x78] sm:$0xff]
    %v255 = vld [vmem:[%s5] sm:$0x3]
    %v257 = vperm.slane %v255, 0
    %v258 = vperm.slane %v255, 1
    %v277 = vunpack.c.l.b16 %v239
    %v278 = vunpack.c.h.b16 %v239
    %v279 = vunpack.c.l.b16 %v240
    %v280 = vunpack.c.h.b16 %v240
    %v281 = vunpack.c.l.b16 %v241
    %v282 = vunpack.c.h.b16 %v241
    %v283 = vunpack.c.l.b16 %v242
    %v284 = vunpack.c.h.b16 %v242
    %v285 = vunpack.c.l.b16 %v243
    %v286 = vunpack.c.h.b16 %v243
    %v287 = vunpack.c.l.b16 %v244
    %v288 = vunpack.c.h.b16 %v244
    %v289 = vunpack.c.l.b16 %v245
    %v290 = vunpack.c.h.b16 %v245
    %v291 = vunpack.c.l.b16 %v246
    %v292 = vunpack.c.h.b16 %v246
    %v293 = vunpack.c.l.b16 %v247
    %v294 = vunpack.c.h.b16 %v247
    %v295 = vunpack.c.l.b16 %v248
    %v296 = vunpack.c.h.b16 %v248
    %v297 = vunpack.c.l.b16 %v249
    %v298 = vunpack.c.h.b16 %v249
    %v299 = vunpack.c.l.b16 %v250
    %v300 = vunpack.c.h.b16 %v250
    %v301 = vunpack.c.l.b16 %v251
    %v302 = vunpack.c.h.b16 %v251
    %v303 = vunpack.c.l.b16 %v252
    %v304 = vunpack.c.h.b16 %v252
    %v305 = vunpack.c.l.b16 %v253
    %v306 = vunpack.c.h.b16 %v253
    %v307 = vunpack.c.l.b16 %v254
    %v308 = vunpack.c.h.b16 %v254
    %v309 = vpack.c.b16 %v279, %v277
    %v310 = vpack.c.b16 %v280, %v278
    %v311 = vpack.c.b16 %v283, %v281
    %v312 = vpack.c.b16 %v284, %v282
    %v313 = vpack.c.b16 %v287, %v285
    %v314 = vpack.c.b16 %v288, %v286
    %v315 = vpack.c.b16 %v291, %v289
    %v316 = vpack.c.b16 %v292, %v290
    %v317 = vpack.c.b16 %v295, %v293
    %v318 = vpack.c.b16 %v296, %v294
    %v319 = vpack.c.b16 %v299, %v297
    %v320 = vpack.c.b16 %v300, %v298
    %v321 = vpack.c.b16 %v303, %v301
    %v322 = vpack.c.b16 %v304, %v302
    %v323 = vpack.c.b16 %v307, %v305
    %v324 = vpack.c.b16 %v308, %v306
    %341 = vmatpush.bf16.msra.mxu0 %v323
    %342 = vmatpush.bf16.msra.mxu0 %v321
    %343 = vmatpush.bf16.msra.mxu0 %v319
    %344 = vmatpush.bf16.msra.mxu0 %v317
    %345 = vmatpush.bf16.msra.mxu0 %v315
    %346 = vmatpush.bf16.msra.mxu0 %v313
    %347 = vmatpush.bf16.msra.mxu0 %v311
    %348 = vmatpush.bf16.msra.mxu0 %v309
    %349 = vmatmul.bf16.gmra.mxu0 %v238
    %v350 = vpop.f32.mrf.mxu0
    %v351 = vadd.f32 %v257, %v350
    %v352 = vpop.f32.mrf.mxu0
    %v353 = vadd.f32 %v257, %v352
    %354 = vdwg.mxu0
    %355 = vmatpush.bf16.msra.mxu0 %v324
    %356 = vmatpush.bf16.msra.mxu0 %v322
    %357 = vmatpush.bf16.msra.mxu0 %v320
    %358 = vmatpush.bf16.msra.mxu0 %v318
    %359 = vmatpush.bf16.msra.mxu0 %v316
    %360 = vmatpush.bf16.msra.mxu0 %v314
    %361 = vmatpush.bf16.msra.mxu0 %v312
    %362 = vmatpush.bf16.msra.mxu0 %v310
    %363 = vmatmul.bf16.gmra.mxu0 %v238
    %v364 = vpop.f32.mrf.mxu0
    %v365 = vadd.f32 %v258, %v364
    %v366 = vpop.f32.mrf.mxu0
    %v367 = vadd.f32 %v258, %v366
    %368 = vdwg.mxu0
    %vm369 = vcmp.gt.f32.partialorder %v351, 0.0
    %vm370 = vcmp.gt.f32.partialorder %v365, 0.0
    %vm371 = vcmp.gt.f32.partialorder %v353, 0.0
    %vm372 = vcmp.gt.f32.partialorder %v367, 0.0
    %v373 = vmul.f32 %v351, 0.2
    %v374 = vmul.f32 %v365, 0.2
    %v375 = vmul.f32 %v353, 0.2
    %v376 = vmul.f32 %v367, 0.2
    %v377 = vsel %vm369, %v351, %v373
    %v378 = vsel %vm370, %v365, %v374
    %v379 = vsel %vm371, %v353, %v375
    %v380 = vsel %vm372, %v367, %v376
    %v381 = vpack.c.bf16 %v379, %v377
    %v382 = vpack.c.bf16 %v380, %v378
    %v383 = vld [vmem:[#allocation6] sm:$0xff]
    %v384 = vld [vmem:[#allocation6 + $0x8] sm:$0xff]
    %v385 = vld [vmem:[#allocation6 + $0x10] sm:$0xff]
    %v386 = vld [vmem:[#allocation6 + $0x18] sm:$0xff]
    %v387 = vld [vmem:[#allocation6 + $0x20] sm:$0xff]
    %v388 = vld [vmem:[#allocation6 + $0x28] sm:$0xff]
    %v389 = vld [vmem:[#allocation6 + $0x30] sm:$0xff]
    %v390 = vld [vmem:[#allocation6 + $0x38] sm:$0xff]
    %v391 = vld [vmem:[#allocation6 + $0x40] sm:$0xff]
    %v392 = vld [vmem:[#allocation6 + $0x48] sm:$0xff]
    %v393 = vld [vmem:[#allocation6 + $0x50] sm:$0xff]
    %v394 = vld [vmem:[#allocation6 + $0x58] sm:$0xff]
    %v395 = vld [vmem:[#allocation6 + $0x60] sm:$0xff]
    %v396 = vld [vmem:[#allocation6 + $0x68] sm:$0xff]
    %v397 = vld [vmem:[#allocation6 + $0x70] sm:$0xff]
    %v398 = vld [vmem:[#allocation6 + $0x78] sm:$0xff]
    %v399 = vld [vmem:[#allocation6 + $0x80] sm:$0xff]
    %v400 = vld [vmem:[#allocation6 + $0x88] sm:$0xff]
    %v401 = vld [vmem:[#allocation6 + $0x90] sm:$0xff]
    %v402 = vld [vmem:[#allocation6 + $0x98] sm:$0xff]
    %v403 = vld [vmem:[#allocation6 + $0xa0] sm:$0xff]
    %v404 = vld [vmem:[#allocation6 + $0xa8] sm:$0xff]
    %v405 = vld [vmem:[#allocation6 + $0xb0] sm:$0xff]
    %v406 = vld [vmem:[#allocation6 + $0xb8] sm:$0xff]
    %v407 = vld [vmem:[#allocation6 + $0xc0] sm:$0xff]
    %v408 = vld [vmem:[#allocation6 + $0xc8] sm:$0xff]
    %v409 = vld [vmem:[#allocation6 + $0xd0] sm:$0xff]
    %v410 = vld [vmem:[#allocation6 + $0xd8] sm:$0xff]
    %v411 = vld [vmem:[#allocation6 + $0xe0] sm:$0xff]
    %v412 = vld [vmem:[#allocation6 + $0xe8] sm:$0xff]
    %v413 = vld [vmem:[#allocation6 + $0xf0] sm:$0xff]
    %v414 = vld [vmem:[#allocation6 + $0xf8] sm:$0xff]
    %v415 = vld [vmem:[#allocation6 + $0x100] sm:$0xff]
    %v416 = vld [vmem:[#allocation6 + $0x108] sm:$0xff]
    %v417 = vld [vmem:[#allocation6 + $0x110] sm:$0xff]
    %v418 = vld [vmem:[#allocation6 + $0x118] sm:$0xff]
    %v419 = vld [vmem:[#allocation6 + $0x120] sm:$0xff]
    %v420 = vld [vmem:[#allocation6 + $0x128] sm:$0xff]
    %v421 = vld [vmem:[#allocation6 + $0x130] sm:$0xff]
    %v422 = vld [vmem:[#allocation6 + $0x138] sm:$0xff]
    %v423 = vld [vmem:[#allocation6 + $0x140] sm:$0xff]
    %v424 = vld [vmem:[#allocation6 + $0x148] sm:$0xff]
    %v425 = vld [vmem:[#allocation6 + $0x150] sm:$0xff]
    %v426 = vld [vmem:[#allocation6 + $0x158] sm:$0xff]
    %v427 = vld [vmem:[#allocation6 + $0x160] sm:$0xff]
    %v428 = vld [vmem:[#allocation6 + $0x168] sm:$0xff]
    %v429 = vld [vmem:[#allocation6 + $0x170] sm:$0xff]
    %v430 = vld [vmem:[#allocation6 + $0x178] sm:$0xff]
    %v431 = vld [vmem:[#allocation6 + $0x180] sm:$0xff]
    %v432 = vld [vmem:[#allocation6 + $0x188] sm:$0xff]
    %v433 = vld [vmem:[#allocation6 + $0x190] sm:$0xff]
    %v434 = vld [vmem:[#allocation6 + $0x198] sm:$0xff]
    %v435 = vld [vmem:[#allocation6 + $0x1a0] sm:$0xff]
    %v436 = vld [vmem:[#allocation6 + $0x1a8] sm:$0xff]
    %v437 = vld [vmem:[#allocation6 + $0x1b0] sm:$0xff]
    %v438 = vld [vmem:[#allocation6 + $0x1b8] sm:$0xff]
    %v439 = vld [vmem:[#allocation6 + $0x1c0] sm:$0xff]
    %v440 = vld [vmem:[#allocation6 + $0x1c8] sm:$0xff]
    %v441 = vld [vmem:[#allocation6 + $0x1d0] sm:$0xff]
    %v442 = vld [vmem:[#allocation6 + $0x1d8] sm:$0xff]
    %v443 = vld [vmem:[#allocation6 + $0x1e0] sm:$0xff]
    %v444 = vld [vmem:[#allocation6 + $0x1e8] sm:$0xff]
    %v445 = vld [vmem:[#allocation6 + $0x1f0] sm:$0xff]
    %v446 = vld [vmem:[#allocation6 + $0x1f8] sm:$0xff]
    %v447 = vld [vmem:[%s7] sm:$0xf]
    %v449 = vperm.slane %v447, 0
    %v450 = vperm.slane %v447, 1
    %v451 = vperm.slane %v447, 2
    %v452 = vperm.slane %v447, 3
    %v521 = vunpack.c.l.b16 %v383
    %v522 = vunpack.c.h.b16 %v383
    %v523 = vunpack.c.l.b16 %v384
    %v524 = vunpack.c.h.b16 %v384
    %v525 = vunpack.c.l.b16 %v385
    %v526 = vunpack.c.h.b16 %v385
    %v527 = vunpack.c.l.b16 %v386
    %v528 = vunpack.c.h.b16 %v386
    %v529 = vunpack.c.l.b16 %v387
    %v530 = vunpack.c.h.b16 %v387
    %v531 = vunpack.c.l.b16 %v388
    %v532 = vunpack.c.h.b16 %v388
    %v533 = vunpack.c.l.b16 %v389
    %v534 = vunpack.c.h.b16 %v389
    %v535 = vunpack.c.l.b16 %v390
    %v536 = vunpack.c.h.b16 %v390
    %v537 = vunpack.c.l.b16 %v391
    %v538 = vunpack.c.h.b16 %v391
    %v539 = vunpack.c.l.b16 %v392
    %v540 = vunpack.c.h.b16 %v392
    %v541 = vunpack.c.l.b16 %v393
    %v542 = vunpack.c.h.b16 %v393
    %v543 = vunpack.c.l.b16 %v394
    %v544 = vunpack.c.h.b16 %v394
    %v545 = vunpack.c.l.b16 %v395
    %v546 = vunpack.c.h.b16 %v395
    %v547 = vunpack.c.l.b16 %v396
    %v548 = vunpack.c.h.b16 %v396
    %v549 = vunpack.c.l.b16 %v397
    %v550 = vunpack.c.h.b16 %v397
    %v551 = vunpack.c.l.b16 %v398
    %v552 = vunpack.c.h.b16 %v398
    %v553 = vunpack.c.l.b16 %v399
    %v554 = vunpack.c.h.b16 %v399
    %v555 = vunpack.c.l.b16 %v400
    %v556 = vunpack.c.h.b16 %v400
    %v557 = vunpack.c.l.b16 %v401
    %v558 = vunpack.c.h.b16 %v401
    %v559 = vunpack.c.l.b16 %v402
    %v560 = vunpack.c.h.b16 %v402
    %v561 = vunpack.c.l.b16 %v403
    %v562 = vunpack.c.h.b16 %v403
    %v563 = vunpack.c.l.b16 %v404
    %v564 = vunpack.c.h.b16 %v404
    %v565 = vunpack.c.l.b16 %v405
    %v566 = vunpack.c.h.b16 %v405
    %v567 = vunpack.c.l.b16 %v406
    %v568 = vunpack.c.h.b16 %v406
    %v569 = vunpack.c.l.b16 %v407
    %v570 = vunpack.c.h.b16 %v407
    %v571 = vunpack.c.l.b16 %v408
    %v572 = vunpack.c.h.b16 %v408
    %v573 = vunpack.c.l.b16 %v409
    %v574 = vunpack.c.h.b16 %v409
    %v575 = vunpack.c.l.b16 %v410
    %v576 = vunpack.c.h.b16 %v410
    %v577 = vunpack.c.l.b16 %v411
    %v578 = vunpack.c.h.b16 %v411
    %v579 = vunpack.c.l.b16 %v412
    %v580 = vunpack.c.h.b16 %v412
    %v581 = vunpack.c.l.b16 %v413
    %v582 = vunpack.c.h.b16 %v413
    %v583 = vunpack.c.l.b16 %v414
    %v584 = vunpack.c.h.b16 %v414
    %v585 = vunpack.c.l.b16 %v415
    %v586 = vunpack.c.h.b16 %v415
    %v587 = vunpack.c.l.b16 %v416
    %v588 = vunpack.c.h.b16 %v416
    %v589 = vunpack.c.l.b16 %v417
    %v590 = vunpack.c.h.b16 %v417
    %v591 = vunpack.c.l.b16 %v418
    %v592 = vunpack.c.h.b16 %v418
    %v593 = vunpack.c.l.b16 %v419
    %v594 = vunpack.c.h.b16 %v419
    %v595 = vunpack.c.l.b16 %v420
    %v596 = vunpack.c.h.b16 %v420
    %v597 = vunpack.c.l.b16 %v421
    %v598 = vunpack.c.h.b16 %v421
    %v599 = vunpack.c.l.b16 %v422
    %v600 = vunpack.c.h.b16 %v422
    %v601 = vunpack.c.l.b16 %v423
    %v602 = vunpack.c.h.b16 %v423
    %v603 = vunpack.c.l.b16 %v424
    %v604 = vunpack.c.h.b16 %v424
    %v605 = vunpack.c.l.b16 %v425
    %v606 = vunpack.c.h.b16 %v425
    %v607 = vunpack.c.l.b16 %v426
    %v608 = vunpack.c.h.b16 %v426
    %v609 = vunpack.c.l.b16 %v427
    %v610 = vunpack.c.h.b16 %v427
    %v611 = vunpack.c.l.b16 %v428
    %v612 = vunpack.c.h.b16 %v428
    %v613 = vunpack.c.l.b16 %v429
    %v614 = vunpack.c.h.b16 %v429
    %v615 = vunpack.c.l.b16 %v430
    %v616 = vunpack.c.h.b16 %v430
    %v617 = vunpack.c.l.b16 %v431
    %v618 = vunpack.c.h.b16 %v431
    %v619 = vunpack.c.l.b16 %v432
    %v620 = vunpack.c.h.b16 %v432
    %v621 = vunpack.c.l.b16 %v433
    %v622 = vunpack.c.h.b16 %v433
    %v623 = vunpack.c.l.b16 %v434
    %v624 = vunpack.c.h.b16 %v434
    %v625 = vunpack.c.l.b16 %v435
    %v626 = vunpack.c.h.b16 %v435
    %v627 = vunpack.c.l.b16 %v436
    %v628 = vunpack.c.h.b16 %v436
    %v629 = vunpack.c.l.b16 %v437
    %v630 = vunpack.c.h.b16 %v437
    %v631 = vunpack.c.l.b16 %v438
    %v632 = vunpack.c.h.b16 %v438
    %v633 = vunpack.c.l.b16 %v439
    %v634 = vunpack.c.h.b16 %v439
    %v635 = vunpack.c.l.b16 %v440
    %v636 = vunpack.c.h.b16 %v440
    %v637 = vunpack.c.l.b16 %v441
    %v638 = vunpack.c.h.b16 %v441
    %v639 = vunpack.c.l.b16 %v442
    %v640 = vunpack.c.h.b16 %v442
    %v641 = vunpack.c.l.b16 %v443
    %v642 = vunpack.c.h.b16 %v443
    %v643 = vunpack.c.l.b16 %v444
    %v644 = vunpack.c.h.b16 %v444
    %v645 = vunpack.c.l.b16 %v445
    %v646 = vunpack.c.h.b16 %v445
    %v647 = vunpack.c.l.b16 %v446
    %v648 = vunpack.c.h.b16 %v446
    %v649 = vpack.c.b16 %v525, %v521
    %v650 = vpack.c.b16 %v526, %v522
    %v651 = vpack.c.b16 %v527, %v523
    %v652 = vpack.c.b16 %v528, %v524
    %v653 = vpack.c.b16 %v533, %v529
    %v654 = vpack.c.b16 %v534, %v530
    %v655 = vpack.c.b16 %v535, %v531
    %v656 = vpack.c.b16 %v536, %v532
    %v657 = vpack.c.b16 %v541, %v537
    %v658 = vpack.c.b16 %v542, %v538
    %v659 = vpack.c.b16 %v543, %v539
    %v660 = vpack.c.b16 %v544, %v540
    %v661 = vpack.c.b16 %v549, %v545
    %v662 = vpack.c.b16 %v550, %v546
    %v663 = vpack.c.b16 %v551, %v547
    %v664 = vpack.c.b16 %v552, %v548
    %v665 = vpack.c.b16 %v557, %v553
    %v666 = vpack.c.b16 %v558, %v554
    %v667 = vpack.c.b16 %v559, %v555
    %v668 = vpack.c.b16 %v560, %v556
    %v669 = vpack.c.b16 %v565, %v561
    %v670 = vpack.c.b16 %v566, %v562
    %v671 = vpack.c.b16 %v567, %v563
    %v672 = vpack.c.b16 %v568, %v564
    %v673 = vpack.c.b16 %v573, %v569
    %v674 = vpack.c.b16 %v574, %v570
    %v675 = vpack.c.b16 %v575, %v571
    %v676 = vpack.c.b16 %v576, %v572
    %v677 = vpack.c.b16 %v581, %v577
    %v678 = vpack.c.b16 %v582, %v578
    %v679 = vpack.c.b16 %v583, %v579
    %v680 = vpack.c.b16 %v584, %v580
    %v681 = vpack.c.b16 %v589, %v585
    %v682 = vpack.c.b16 %v590, %v586
    %v683 = vpack.c.b16 %v591, %v587
    %v684 = vpack.c.b16 %v592, %v588
    %v685 = vpack.c.b16 %v597, %v593
    %v686 = vpack.c.b16 %v598, %v594
    %v687 = vpack.c.b16 %v599, %v595
    %v688 = vpack.c.b16 %v600, %v596
    %v689 = vpack.c.b16 %v605, %v601
    %v690 = vpack.c.b16 %v606, %v602
    %v691 = vpack.c.b16 %v607, %v603
    %v692 = vpack.c.b16 %v608, %v604
    %v693 = vpack.c.b16 %v613, %v609
    %v694 = vpack.c.b16 %v614, %v610
    %v695 = vpack.c.b16 %v615, %v611
    %v696 = vpack.c.b16 %v616, %v612
    %v697 = vpack.c.b16 %v621, %v617
    %v698 = vpack.c.b16 %v622, %v618
    %v699 = vpack.c.b16 %v623, %v619
    %v700 = vpack.c.b16 %v624, %v620
    %v701 = vpack.c.b16 %v629, %v625
    %v702 = vpack.c.b16 %v630, %v626
    %v703 = vpack.c.b16 %v631, %v627
    %v704 = vpack.c.b16 %v632, %v628
    %v705 = vpack.c.b16 %v637, %v633
    %v706 = vpack.c.b16 %v638, %v634
    %v707 = vpack.c.b16 %v639, %v635
    %v708 = vpack.c.b16 %v640, %v636
    %v709 = vpack.c.b16 %v645, %v641
    %v710 = vpack.c.b16 %v646, %v642
    %v711 = vpack.c.b16 %v647, %v643
    %v712 = vpack.c.b16 %v648, %v644
    %777 = vmatpush.bf16.msra.mxu0 %v677
    %778 = vmatpush.bf16.msra.mxu0 %v673
    %779 = vmatpush.bf16.msra.mxu0 %v669
    %780 = vmatpush.bf16.msra.mxu0 %v665
    %781 = vmatpush.bf16.msra.mxu0 %v661
    %782 = vmatpush.bf16.msra.mxu0 %v657
    %783 = vmatpush.bf16.msra.mxu0 %v653
    %784 = vmatpush.bf16.msra.mxu0 %v649
    %785 = vmatmul.bf16.gmra.mxu0 %v381
    %v786 = vpop.f32.mrf.mxu0
    %v787 = vadd.f32 %v449, %v786
    %v788 = vpop.f32.mrf.mxu0
    %v789 = vadd.f32 %v449, %v788
    %790 = vdwg.mxu0
    %791 = vmatpush.bf16.msra.mxu0 %v709
    %792 = vmatpush.bf16.msra.mxu0 %v705
    %793 = vmatpush.bf16.msra.mxu0 %v701
    %794 = vmatpush.bf16.msra.mxu0 %v697
    %795 = vmatpush.bf16.msra.mxu0 %v693
    %796 = vmatpush.bf16.msra.mxu0 %v689
    %797 = vmatpush.bf16.msra.mxu0 %v685
    %798 = vmatpush.bf16.msra.mxu0 %v681
    %799 = vmatmul.bf16.gmra.mxu0 %v382
    %v800 = vpop.f32.mrf.mxu0
    %v801 = vadd.f32 %v787, %v800
    %v802 = vpop.f32.mrf.mxu0
    %v803 = vadd.f32 %v789, %v802
    %804 = vdwg.mxu0
    %805 = vmatpush.bf16.msra.mxu0 %v678
    %806 = vmatpush.bf16.msra.mxu0 %v674
    %807 = vmatpush.bf16.msra.mxu0 %v670
    %808 = vmatpush.bf16.msra.mxu0 %v666
    %809 = vmatpush.bf16.msra.mxu0 %v662
    %810 = vmatpush.bf16.msra.mxu0 %v658
    %811 = vmatpush.bf16.msra.mxu0 %v654
    %812 = vmatpush.bf16.msra.mxu0 %v650
    %813 = vmatmul.bf16.gmra.mxu0 %v381
    %v814 = vpop.f32.mrf.mxu0
    %v815 = vadd.f32 %v450, %v814
    %v816 = vpop.f32.mrf.mxu0
    %v817 = vadd.f32 %v450, %v816
    %818 = vdwg.mxu0
    %819 = vmatpush.bf16.msra.mxu0 %v710
    %820 = vmatpush.bf16.msra.mxu0 %v706
    %821 = vmatpush.bf16.msra.mxu0 %v702
    %822 = vmatpush.bf16.msra.mxu0 %v698
    %823 = vmatpush.bf16.msra.mxu0 %v694
    %824 = vmatpush.bf16.msra.mxu0 %v690
    %825 = vmatpush.bf16.msra.mxu0 %v686
    %826 = vmatpush.bf16.msra.mxu0 %v682
    %827 = vmatmul.bf16.gmra.mxu0 %v382
    %v828 = vpop.f32.mrf.mxu0
    %v829 = vadd.f32 %v815, %v828
    %v830 = vpop.f32.mrf.mxu0
    %v831 = vadd.f32 %v817, %v830
    %832 = vdwg.mxu0
    %833 = vmatpush.bf16.msra.mxu0 %v679
    %834 = vmatpush.bf16.msra.mxu0 %v675
    %835 = vmatpush.bf16.msra.mxu0 %v671
    %836 = vmatpush.bf16.msra.mxu0 %v667
    %837 = vmatpush.bf16.msra.mxu0 %v663
    %838 = vmatpush.bf16.msra.mxu0 %v659
    %839 = vmatpush.bf16.msra.mxu0 %v655
    %840 = vmatpush.bf16.msra.mxu0 %v651
    %841 = vmatmul.bf16.gmra.mxu0 %v381
    %v842 = vpop.f32.mrf.mxu0
    %v843 = vadd.f32 %v451, %v842
    %v844 = vpop.f32.mrf.mxu0
    %v845 = vadd.f32 %v451, %v844
    %846 = vdwg.mxu0
    %847 = vmatpush.bf16.msra.mxu0 %v711
    %848 = vmatpush.bf16.msra.mxu0 %v707
    %849 = vmatpush.bf16.msra.mxu0 %v703
    %850 = vmatpush.bf16.msra.mxu0 %v699
    %851 = vmatpush.bf16.msra.mxu0 %v695
    %852 = vmatpush.bf16.msra.mxu0 %v691
    %853 = vmatpush.bf16.msra.mxu0 %v687
    %854 = vmatpush.bf16.msra.mxu0 %v683
    %855 = vmatmul.bf16.gmra.mxu0 %v382
    %v856 = vpop.f32.mrf.mxu0
    %v857 = vadd.f32 %v843, %v856
    %v858 = vpop.f32.mrf.mxu0
    %v859 = vadd.f32 %v845, %v858
    %860 = vdwg.mxu0
    %861 = vmatpush.bf16.msra.mxu0 %v680
    %862 = vmatpush.bf16.msra.mxu0 %v676
    %863 = vmatpush.bf16.msra.mxu0 %v672
    %864 = vmatpush.bf16.msra.mxu0 %v668
    %865 = vmatpush.bf16.msra.mxu0 %v664
    %866 = vmatpush.bf16.msra.mxu0 %v660
    %867 = vmatpush.bf16.msra.mxu0 %v656
    %868 = vmatpush.bf16.msra.mxu0 %v652
    %869 = vmatmul.bf16.gmra.mxu0 %v381
    %v870 = vpop.f32.mrf.mxu0
    %v871 = vadd.f32 %v452, %v870
    %v872 = vpop.f32.mrf.mxu0
    %v873 = vadd.f32 %v452, %v872
    %874 = vdwg.mxu0
    %875 = vmatpush.bf16.msra.mxu0 %v712
    %876 = vmatpush.bf16.msra.mxu0 %v708
    %877 = vmatpush.bf16.msra.mxu0 %v704
    %878 = vmatpush.bf16.msra.mxu0 %v700
    %879 = vmatpush.bf16.msra.mxu0 %v696
    %880 = vmatpush.bf16.msra.mxu0 %v692
    %881 = vmatpush.bf16.msra.mxu0 %v688
    %882 = vmatpush.bf16.msra.mxu0 %v684
    %883 = vmatmul.bf16.gmra.mxu0 %v382
    %v884 = vpop.f32.mrf.mxu0
    %v885 = vadd.f32 %v871, %v884
    %v886 = vpop.f32.mrf.mxu0
    %v887 = vadd.f32 %v873, %v886
    %888 = vdwg.mxu0
    %vm889 = vcmp.gt.f32.partialorder %v801, 0.0
    %vm890 = vcmp.gt.f32.partialorder %v829, 0.0
    %vm891 = vcmp.gt.f32.partialorder %v857, 0.0
    %vm892 = vcmp.gt.f32.partialorder %v885, 0.0
    %vm893 = vcmp.gt.f32.partialorder %v803, 0.0
    %vm894 = vcmp.gt.f32.partialorder %v831, 0.0
    %vm895 = vcmp.gt.f32.partialorder %v859, 0.0
    %vm896 = vcmp.gt.f32.partialorder %v887, 0.0
    %v897 = vmul.f32 %v801, 0.2
    %v898 = vmul.f32 %v829, 0.2
    %v899 = vmul.f32 %v857, 0.2
    %v900 = vmul.f32 %v885, 0.2
    %v901 = vmul.f32 %v803, 0.2
    %v902 = vmul.f32 %v831, 0.2
    %v903 = vmul.f32 %v859, 0.2
    %v904 = vmul.f32 %v887, 0.2
    %v905 = vsel %vm889, %v801, %v897
    %v906 = vsel %vm890, %v829, %v898
    %v907 = vsel %vm891, %v857, %v899
    %v908 = vsel %vm892, %v885, %v900
    %v909 = vsel %vm893, %v803, %v901
    %v910 = vsel %vm894, %v831, %v902
    %v911 = vsel %vm895, %v859, %v903
    %v912 = vsel %vm896, %v887, %v904
    %v913 = vpack.c.bf16 %v909, %v905
    %v914 = vpack.c.bf16 %v910, %v906
    %v915 = vpack.c.bf16 %v911, %v907
    %v916 = vpack.c.bf16 %v912, %v908
    %v917 = vld [vmem:[#allocation7] sm:$0xf]
    %v918 = vld [vmem:[#allocation7 + $0x4] sm:$0xf]
    %v919 = vld [vmem:[#allocation7 + $0x8] sm:$0xf]
    %v920 = vld [vmem:[#allocation7 + $0xc] sm:$0xf]
    %v921 = vld [vmem:[#allocation7 + $0x10] sm:$0xf]
    %v922 = vld [vmem:[#allocation7 + $0x14] sm:$0xf]
    %v923 = vld [vmem:[#allocation7 + $0x18] sm:$0xf]
    %v924 = vld [vmem:[#allocation7 + $0x1c] sm:$0xf]
    %v925 = vld [vmem:[#allocation7 + $0x20] sm:$0xf]
    %v926 = vld [vmem:[#allocation7 + $0x24] sm:$0xf]
    %v927 = vld [vmem:[#allocation7 + $0x28] sm:$0xf]
    %v928 = vld [vmem:[#allocation7 + $0x2c] sm:$0xf]
    %v929 = vld [vmem:[#allocation7 + $0x30] sm:$0xf]
    %v930 = vld [vmem:[#allocation7 + $0x34] sm:$0xf]
    %v931 = vld [vmem:[#allocation7 + $0x38] sm:$0xf]
    %v932 = vld [vmem:[#allocation7 + $0x3c] sm:$0xf]
    %v933 = vld [vmem:[#allocation7 + $0x40] sm:$0xf]
    %v934 = vld [vmem:[#allocation7 + $0x44] sm:$0xf]
    %v935 = vld [vmem:[#allocation7 + $0x48] sm:$0xf]
    %v936 = vld [vmem:[#allocation7 + $0x4c] sm:$0xf]
    %v937 = vld [vmem:[#allocation7 + $0x50] sm:$0xf]
    %v938 = vld [vmem:[#allocation7 + $0x54] sm:$0xf]
    %v939 = vld [vmem:[#allocation7 + $0x58] sm:$0xf]
    %v940 = vld [vmem:[#allocation7 + $0x5c] sm:$0xf]
    %v941 = vld [vmem:[#allocation7 + $0x60] sm:$0xf]
    %v942 = vld [vmem:[#allocation7 + $0x64] sm:$0xf]
    %v943 = vld [vmem:[#allocation7 + $0x68] sm:$0xf]
    %v944 = vld [vmem:[#allocation7 + $0x6c] sm:$0xf]
    %v945 = vld [vmem:[#allocation7 + $0x70] sm:$0xf]
    %v946 = vld [vmem:[#allocation7 + $0x74] sm:$0xf]
    %v947 = vld [vmem:[#allocation7 + $0x78] sm:$0xf]
    %v948 = vld [vmem:[#allocation7 + $0x7c] sm:$0xf]
    %v949 = vld [vmem:[#allocation7 + $0x80] sm:$0xf]
    %v950 = vld [vmem:[#allocation7 + $0x84] sm:$0xf]
    %v951 = vld [vmem:[#allocation7 + $0x88] sm:$0xf]
    %v952 = vld [vmem:[#allocation7 + $0x8c] sm:$0xf]
    %v953 = vld [vmem:[#allocation7 + $0x90] sm:$0xf]
    %v954 = vld [vmem:[#allocation7 + $0x94] sm:$0xf]
    %v955 = vld [vmem:[#allocation7 + $0x98] sm:$0xf]
    %v956 = vld [vmem:[#allocation7 + $0x9c] sm:$0xf]
    %v957 = vld [vmem:[#allocation7 + $0xa0] sm:$0xf]
    %v958 = vld [vmem:[#allocation7 + $0xa4] sm:$0xf]
    %v959 = vld [vmem:[#allocation7 + $0xa8] sm:$0xf]
    %v960 = vld [vmem:[#allocation7 + $0xac] sm:$0xf]
    %v961 = vld [vmem:[#allocation7 + $0xb0] sm:$0xf]
    %v962 = vld [vmem:[#allocation7 + $0xb4] sm:$0xf]
    %v963 = vld [vmem:[#allocation7 + $0xb8] sm:$0xf]
    %v964 = vld [vmem:[#allocation7 + $0xbc] sm:$0xf]
    %v965 = vld [vmem:[#allocation7 + $0xc0] sm:$0xf]
    %v966 = vld [vmem:[#allocation7 + $0xc4] sm:$0xf]
    %v967 = vld [vmem:[#allocation7 + $0xc8] sm:$0xf]
    %v968 = vld [vmem:[#allocation7 + $0xcc] sm:$0xf]
    %v969 = vld [vmem:[#allocation7 + $0xd0] sm:$0xf]
    %v970 = vld [vmem:[#allocation7 + $0xd4] sm:$0xf]
    %v971 = vld [vmem:[#allocation7 + $0xd8] sm:$0xf]
    %v972 = vld [vmem:[#allocation7 + $0xdc] sm:$0xf]
    %v973 = vld [vmem:[#allocation7 + $0xe0] sm:$0xf]
    %v974 = vld [vmem:[#allocation7 + $0xe4] sm:$0xf]
    %v975 = vld [vmem:[#allocation7 + $0xe8] sm:$0xf]
    %v976 = vld [vmem:[#allocation7 + $0xec] sm:$0xf]
    %v977 = vld [vmem:[#allocation7 + $0xf0] sm:$0xf]
    %v978 = vld [vmem:[#allocation7 + $0xf4] sm:$0xf]
    %v979 = vld [vmem:[#allocation7 + $0xf8] sm:$0xf]
    %v980 = vld [vmem:[#allocation7 + $0xfc] sm:$0xf]
    %v981 = vld [vmem:[%s9] sm:$0x1]
    %v983 = vperm.slane %v981, 0
    %v1049 = vunpack.c.l.b16 %v917
    %v1050 = vunpack.c.l.b16 %v918
    %v1051 = vunpack.c.l.b16 %v919
    %v1052 = vunpack.c.l.b16 %v920
    %v1053 = vunpack.c.l.b16 %v921
    %v1054 = vunpack.c.l.b16 %v922
    %v1055 = vunpack.c.l.b16 %v923
    %v1056 = vunpack.c.l.b16 %v924
    %v1057 = vunpack.c.l.b16 %v925
    %v1058 = vunpack.c.l.b16 %v926
    %v1059 = vunpack.c.l.b16 %v927
    %v1060 = vunpack.c.l.b16 %v928
    %v1061 = vunpack.c.l.b16 %v929
    %v1062 = vunpack.c.l.b16 %v930
    %v1063 = vunpack.c.l.b16 %v931
    %v1064 = vunpack.c.l.b16 %v932
    %v1065 = vunpack.c.l.b16 %v933
    %v1066 = vunpack.c.l.b16 %v934
    %v1067 = vunpack.c.l.b16 %v935
    %v1068 = vunpack.c.l.b16 %v936
    %v1069 = vunpack.c.l.b16 %v937
    %v1070 = vunpack.c.l.b16 %v938
    %v1071 = vunpack.c.l.b16 %v939
    %v1072 = vunpack.c.l.b16 %v940
    %v1073 = vunpack.c.l.b16 %v941
    %v1074 = vunpack.c.l.b16 %v942
    %v1075 = vunpack.c.l.b16 %v943
    %v1076 = vunpack.c.l.b16 %v944
    %v1077 = vunpack.c.l.b16 %v945
    %v1078 = vunpack.c.l.b16 %v946
    %v1079 = vunpack.c.l.b16 %v947
    %v1080 = vunpack.c.l.b16 %v948
    %v1081 = vunpack.c.l.b16 %v949
    %v1082 = vunpack.c.l.b16 %v950
    %v1083 = vunpack.c.l.b16 %v951
    %v1084 = vunpack.c.l.b16 %v952
    %v1085 = vunpack.c.l.b16 %v953
    %v1086 = vunpack.c.l.b16 %v954
    %v1087 = vunpack.c.l.b16 %v955
    %v1088 = vunpack.c.l.b16 %v956
    %v1089 = vunpack.c.l.b16 %v957
    %v1090 = vunpack.c.l.b16 %v958
    %v1091 = vunpack.c.l.b16 %v959
    %v1092 = vunpack.c.l.b16 %v960
    %v1093 = vunpack.c.l.b16 %v961
    %v1094 = vunpack.c.l.b16 %v962
    %v1095 = vunpack.c.l.b16 %v963
    %v1096 = vunpack.c.l.b16 %v964
    %v1097 = vunpack.c.l.b16 %v965
    %v1098 = vunpack.c.l.b16 %v966
    %v1099 = vunpack.c.l.b16 %v967
    %v1100 = vunpack.c.l.b16 %v968
    %v1101 = vunpack.c.l.b16 %v969
    %v1102 = vunpack.c.l.b16 %v970
    %v1103 = vunpack.c.l.b16 %v971
    %v1104 = vunpack.c.l.b16 %v972
    %v1105 = vunpack.c.l.b16 %v973
    %v1106 = vunpack.c.l.b16 %v974
    %v1107 = vunpack.c.l.b16 %v975
    %v1108 = vunpack.c.l.b16 %v976
    %v1109 = vunpack.c.l.b16 %v977
    %v1110 = vunpack.c.l.b16 %v978
    %v1111 = vunpack.c.l.b16 %v979
    %v1112 = vunpack.c.l.b16 %v980
    %v1113 = vpack.c.b16 %v1050, %v1049
    %v1114 = vpack.c.b16 %v1052, %v1051
    %v1115 = vpack.c.b16 %v1054, %v1053
    %v1116 = vpack.c.b16 %v1056, %v1055
    %v1117 = vpack.c.b16 %v1058, %v1057
    %v1118 = vpack.c.b16 %v1060, %v1059
    %v1119 = vpack.c.b16 %v1062, %v1061
    %v1120 = vpack.c.b16 %v1064, %v1063
    %v1121 = vpack.c.b16 %v1066, %v1065
    %v1122 = vpack.c.b16 %v1068, %v1067
    %v1123 = vpack.c.b16 %v1070, %v1069
    %v1124 = vpack.c.b16 %v1072, %v1071
    %v1125 = vpack.c.b16 %v1074, %v1073
    %v1126 = vpack.c.b16 %v1076, %v1075
    %v1127 = vpack.c.b16 %v1078, %v1077
    %v1128 = vpack.c.b16 %v1080, %v1079
    %v1129 = vpack.c.b16 %v1082, %v1081
    %v1130 = vpack.c.b16 %v1084, %v1083
    %v1131 = vpack.c.b16 %v1086, %v1085
    %v1132 = vpack.c.b16 %v1088, %v1087
    %v1133 = vpack.c.b16 %v1090, %v1089
    %v1134 = vpack.c.b16 %v1092, %v1091
    %v1135 = vpack.c.b16 %v1094, %v1093
    %v1136 = vpack.c.b16 %v1096, %v1095
    %v1137 = vpack.c.b16 %v1098, %v1097
    %v1138 = vpack.c.b16 %v1100, %v1099
    %v1139 = vpack.c.b16 %v1102, %v1101
    %v1140 = vpack.c.b16 %v1104, %v1103
    %v1141 = vpack.c.b16 %v1106, %v1105
    %v1142 = vpack.c.b16 %v1108, %v1107
    %v1143 = vpack.c.b16 %v1110, %v1109
    %v1144 = vpack.c.b16 %v1112, %v1111
    %1177 = vmatpush.bf16.msra.mxu0 %v1120
    %1178 = vmatpush.bf16.msra.mxu0 %v1119
    %1179 = vmatpush.bf16.msra.mxu0 %v1118
    %1180 = vmatpush.bf16.msra.mxu0 %v1117
    %1181 = vmatpush.bf16.msra.mxu0 %v1116
    %1182 = vmatpush.bf16.msra.mxu0 %v1115
    %1183 = vmatpush.bf16.msra.mxu0 %v1114
    %1184 = vmatpush.bf16.msra.mxu0 %v1113
    %1185 = vmatmul.bf16.gmra.mxu0 %v913
    %v1186 = vpop.f32.mrf.mxu0
    %v1187 = vadd.f32 %v983, %v1186
    %v1188 = vpop.f32.mrf.mxu0
    %v1189 = vadd.f32 %v983, %v1188
    %1190 = vdwg.mxu0
    %1191 = vmatpush.bf16.msra.mxu0 %v1128
    %1192 = vmatpush.bf16.msra.mxu0 %v1127
    %1193 = vmatpush.bf16.msra.mxu0 %v1126
    %1194 = vmatpush.bf16.msra.mxu0 %v1125
    %1195 = vmatpush.bf16.msra.mxu0 %v1124
    %1196 = vmatpush.bf16.msra.mxu0 %v1123
    %1197 = vmatpush.bf16.msra.mxu0 %v1122
    %1198 = vmatpush.bf16.msra.mxu0 %v1121
    %1199 = vmatmul.bf16.gmra.mxu0 %v914
    %v1200 = vpop.f32.mrf.mxu0
    %v1201 = vadd.f32 %v1187, %v1200
    %v1202 = vpop.f32.mrf.mxu0
    %v1203 = vadd.f32 %v1189, %v1202
    %1204 = vdwg.mxu0
    %1205 = vmatpush.bf16.msra.mxu0 %v1136
    %1206 = vmatpush.bf16.msra.mxu0 %v1135
    %1207 = vmatpush.bf16.msra.mxu0 %v1134
    %1208 = vmatpush.bf16.msra.mxu0 %v1133
    %1209 = vmatpush.bf16.msra.mxu0 %v1132
    %1210 = vmatpush.bf16.msra.mxu0 %v1131
    %1211 = vmatpush.bf16.msra.mxu0 %v1130
    %1212 = vmatpush.bf16.msra.mxu0 %v1129
    %1213 = vmatmul.bf16.gmra.mxu0 %v915
    %v1214 = vpop.f32.mrf.mxu0
    %v1215 = vadd.f32 %v1201, %v1214
    %v1216 = vpop.f32.mrf.mxu0
    %v1217 = vadd.f32 %v1203, %v1216
    %1218 = vdwg.mxu0
    %1219 = vmatpush.bf16.msra.mxu0 %v1144
    %1220 = vmatpush.bf16.msra.mxu0 %v1143
    %1221 = vmatpush.bf16.msra.mxu0 %v1142
    %1222 = vmatpush.bf16.msra.mxu0 %v1141
    %1223 = vmatpush.bf16.msra.mxu0 %v1140
    %1224 = vmatpush.bf16.msra.mxu0 %v1139
    %1225 = vmatpush.bf16.msra.mxu0 %v1138
    %1226 = vmatpush.bf16.msra.mxu0 %v1137
    %1227 = vmatmul.bf16.gmra.mxu0 %v916
    %v1228 = vpop.f32.mrf.mxu0
    %v1229 = vadd.f32 %v1215, %v1228
    %v1230 = vpop.f32.mrf.mxu0
    %v1231 = vadd.f32 %v1217, %v1230
    %1232 = vdwg.mxu0
    %1233 = vmax.xlane.f32.xlu0 %v1229
    %v1234 = vpop.xlane.xlu0 %1233
    %1235 = vmax.xlane.f32.xlu0 %v1231
    %v1236 = vpop.xlane.xlu0 %1235
    %v1237 = vsub.f32 %v1229, %v1234
    %v1238 = vsub.f32 %v1231, %v1236
    %v1239 = vmul.f32 %v1237, 1.442695
    %v1240 = vpow.pop %v1239
    %v1241 = vmul.f32 %v1238, 1.442695
    %v1242 = vpow.pop %v1241
    %1243 = vadd.xlane.f32.xlu0 %v1240
    %v1244 = vpop.xlane.xlu0 %1243
    %1245 = vadd.xlane.f32.xlu0 %v1242
    %v1246 = vpop.xlane.xlu0 %1245
    %v1247 = vrcp.pop %v1244
    %v1248 = vrcp.pop %v1246
    %v1249 = vmul.f32 %v1240, %v1247
    %v1250 = vmul.f32 %v1242, %v1248
    %1251 = vst [vmem:[%s10] sm:$0xff] %v1249
    %1252 = vst [vmem:[%s10 + $0x8] sm:$0xff] %v1250
    // Predicated region
    $region58: #{generator_forward.1} parent=1 // pred_check
      _
    $region59: #{generator_forward.1} parent=1 // pred_check_branch
      %1254 = sbr.rel (0) target = $region61
    $region60: #{generator_forward.1} parent=1 // pred_region
      _
    $region61: #{generator_forward.1} parent=1 // pred_fallthru
      _
    // Predicated region
    $region62: #{generator_forward.1} parent=1 // pred_check
      _
    $region63: #{generator_forward.1} parent=1 // pred_check_branch
      %1256 = sbr.rel (0) target = $region65
    $region64: #{generator_forward.1} parent=1 // pred_region
      _
    $region65: #{generator_forward.1} parent=1 // pred_fallthru
      _
    %1257 = vsyncpa [#allocation3], 1
    %1258 = vsyncpa [#allocation5], 1
    %1259 = vsyncpa [#allocation8], 1

</llo_original>
